<compile_context>
chip_gen: v5e
topology: v5e:2x2
jax: 0.10.0
libtpu: 0.0.40
codegen_flags: <defaults>
</compile_context>

<pallas_src>
import jax
import jax.numpy as jnp
from jax.experimental import pallas as pl
from jax.experimental.pallas import tpu as pltpu


def _boxpool_mul_kernel(mask_ref, x_ref, o_ref):
    # mask_ref: (rb, HW) resident block (constant index_map -> DMA'd once per core)
    # x_ref / o_ref: (rb, HW) row block of the flattened (B*C, H*W) tensor
    o_ref[...] = x_ref[...] * mask_ref[...]


def _box_mask(theta, H, W):
    """Closed form of grid_sample(ones, affine_grid(theta), bilinear, zeros,
    align_corners=False): per-channel trapezoid mask, shape (C, H*W), f32."""
    Hf, Wf = float(H), float(W)
    jj = jnp.arange(W, dtype=jnp.float32)
    ii = jnp.arange(H, dtype=jnp.float32)
    xn = (2.0 * jj + 1.0) / Wf - 1.0                       # (W,)
    yn = (2.0 * ii + 1.0) / Hf - 1.0                       # (H,)
    xn = jnp.broadcast_to(xn[None, :], (H, W)).reshape(1, H * W)
    yn = jnp.broadcast_to(yn[:, None], (H, W)).reshape(1, H * W)

    a, b, c = theta[:, 0:1], theta[:, 1:2], theta[:, 2:3]  # (C, 1)
    d, e, f = theta[:, 3:4], theta[:, 4:5], theta[:, 5:6]
    xs = a * xn + b * yn + c                               # (C, HW)
    ys = d * xn + e * yn + f

    ix = ((xs + 1.0) * Wf - 1.0) * 0.5                     # pixel sample coords
    iy = ((ys + 1.0) * Hf - 1.0) * 0.5
    fx = jnp.clip(jnp.minimum(ix + 1.0, Wf - ix), 0.0, 1.0)
    fy = jnp.clip(jnp.minimum(iy + 1.0, Hf - iy), 0.0, 1.0)
    return fx * fy                                         # (C, HW) f32


def _choose_row_block(B, C, HW, itemsize):
    """Rows per block: divides B*C (full blocks), multiple of C (mask tile
    lines up with channels), multiple of 8 unless it spans all rows (full
    sublanes), and <= ~2 MiB so double-buffered in/out + resident mask stays
    well under v7x's 32 MiB scoped-VMEM default."""
    R = B * C
    cands = [C * g for g in range(1, B + 1) if B % g == 0]
    cands = sorted(c for c in cands if c == R or c % 8 == 0)
    if not cands:
        cands = [R]
    target = 2 << 20
    fitting = [c for c in cands if c * HW * itemsize <= target]
    rb = max(fitting) if fitting else min(cands)
    # TODO(synk): for H*W so large that even C rows exceed the budget, add an
    # HW-axis grid dimension instead of growing the row block.
    if R * HW * itemsize >= (1 << 20) and R // rb < 2:
        smaller = [c for c in cands if c < rb]
        if smaller:  # keep >= 2 parallel steps so both v7x TensorCores get work
            rb = max(smaller)
    return rb


@jax.jit
def box_pool(x, box_params):
    """BoxPool forward: x * grid_sample(ones_like(x), affine_grid(boxParams)).

    x: (B, C, H, W); box_params: (C, 2, 3) per-channel affine theta.
    """
    B, C, H, W = x.shape
    HW = H * W
    R = B * C

    theta = box_params.reshape(C, 6).astype(jnp.float32)

    # Hoisted, theta-only mask (computed once, not per batch step).
    mask = _box_mask(theta, H, W)                          # (C, HW) f32

    rb = _choose_row_block(B, C, HW, x.dtype.itemsize)
    # Replicate to one row block; row r of any block has channel r % C because
    # rb % C == 0, so the same resident tile is valid for every grid step.
    # Cast once to x.dtype -> bf16 multiply on v6e/v7x when x is bf16.
    mask_rb = jnp.tile(mask, (rb // C, 1)).astype(x.dtype)  # (rb, HW)

    x_rows = x.reshape(R, HW)   # free reshape: lane dim = H*W, sublanes = rows
    # Note: block last dim == full array dim, so non-128-multiple H*W still
    # compiles; H*W = 256 here gives unmasked full-lane stores.

    out = pl.pallas_call(
        _boxpool_mul_kernel,
        out_shape=jax.ShapeDtypeStruct((R, HW), x.dtype),
        grid_spec=pltpu.PrefetchScalarGridSpec(
            num_scalar_prefetch=0,
            grid=(R // rb,),
            in_specs=[
                pl.BlockSpec((rb, HW), lambda r: (0, 0)),   # resident mask
                pl.BlockSpec((rb, HW), lambda r: (r, 0)),   # x row block
            ],
            out_specs=pl.BlockSpec((rb, HW), lambda r: (r, 0)),
        ),
        compiler_params=pltpu.CompilerParams(
            dimension_semantics=("parallel",)),
    )(mask_rb, x_rows)
    return out.reshape(B, C, H, W)


def _reference(x, box_params):
    """Pure-JAX reference: faithful 4-corner grid_sample(ones) weight sum."""
    B, C, H, W = x.shape
    jj = jnp.arange(W, dtype=jnp.float32)
    ii = jnp.arange(H, dtype=jnp.float32)
    xn = (2.0 * jj + 1.0) / W - 1.0
    yn = (2.0 * ii + 1.0) / H - 1.0
    xn = jnp.broadcast_to(xn[None, :], (H, W))
    yn = jnp.broadcast_to(yn[:, None], (H, W))
    a, b, c = box_params[:, 0, 0], box_params[:, 0, 1], box_params[:, 0, 2]
    d, e, f = box_params[:, 1, 0], box_params[:, 1, 1], box_params[:, 1, 2]
    xs = a[:, None, None] * xn + b[:, None, None] * yn + c[:, None, None]
    ys = d[:, None, None] * xn + e[:, None, None] * yn + f[:, None, None]
    ix = ((xs + 1.0) * W - 1.0) * 0.5
    iy = ((ys + 1.0) * H - 1.0) * 0.5
    ix0, iy0 = jnp.floor(ix), jnp.floor(iy)
    ix1, iy1 = ix0 + 1.0, iy0 + 1.0
    wx1, wy1 = ix - ix0, iy - iy0
    wx0, wy0 = 1.0 - wx1, 1.0 - wy1
    inb = lambda v, n: ((v >= 0.0) & (v <= n - 1.0)).astype(jnp.float32)
    box = (wx0 * wy0 * inb(ix0, W) * inb(iy0, H)
           + wx1 * wy0 * inb(ix1, W) * inb(iy0, H)
           + wx0 * wy1 * inb(ix0, W) * inb(iy1, H)
           + wx1 * wy1 * inb(ix1, W) * inb(iy1, H))        # (C, H, W)
    return x * box[None, :, :, :]


if __name__ == "__main__":
    key = jax.random.PRNGKey(0)
    k_noise, k_x = jax.random.split(key)

    B, C, H, W = 2, 4, 16, 16

    # Parameter init mirrors the PyTorch module:
    # eye(3)[:2] expanded to (chan, 2, 3) plus N(0, 0.1) noise.
    init_val = jnp.broadcast_to(jnp.eye(3, dtype=jnp.float32)[:2][None], (C, 2, 3))
    noise = 0.1 * jax.random.normal(k_noise, (C, 2, 3), dtype=jnp.float32)
    box_params = init_val + noise

    x = jax.random.normal(k_x, (B, C, H, W), dtype=jnp.float32)

    out = jax.block_until_ready(box_pool(x, box_params))
    ref = _reference(x, box_params)

    assert out.shape == (B, C, H, W)
    max_err = float(jnp.max(jnp.abs(out - ref)))
    assert jnp.allclose(out, ref, atol=1e-5, rtol=1e-5), max_err

    print("KERNEL_OK")
</pallas_src>

<mosaic_0001>
module attributes {stable_mosaic.version = 11 : i64} {
  func.func @_boxpool_mul_kernel(%arg0: i32, %arg1: memref<8x256xf32, #tpu.memory_space<vmem>>, %arg2: memref<8x256xf32, #tpu.memory_space<vmem>>, %arg3: memref<8x256xf32, #tpu.memory_space<vmem>>) attributes {dimension_semantics = [#tpu.dimension_semantics<parallel>], iteration_bounds = array<i64: 1>, scalar_prefetch = 0 : i64, scratch_operands = 0 : i64, tpu.core_type = #tpu.core_type<tc>, window_params = [{pipeline_mode = #tpu.pipeline_mode<synchronous>, transform_indices = @transform_0, window_bounds = array<i64: 8, 256>}, {transform_indices = @transform_1, window_bounds = array<i64: 8, 256>}, {transform_indices = @transform_2, window_bounds = array<i64: 8, 256>}]} {
    %c0 = arith.constant 0 : index
    %c0_0 = arith.constant 0 : index
    %0 = vector.load %arg2[%c0, %c0_0] : memref<8x256xf32, #tpu.memory_space<vmem>>, vector<8x256xf32>
    %c0_1 = arith.constant 0 : index
    %c0_2 = arith.constant 0 : index
    %1 = vector.load %arg1[%c0_1, %c0_2] : memref<8x256xf32, #tpu.memory_space<vmem>>, vector<8x256xf32>
    %2 = arith.mulf %0, %1 : vector<8x256xf32>
    %c0_3 = arith.constant 0 : index
    %c0_4 = arith.constant 0 : index
    %3 = vector.load %arg3[%c0_3, %c0_4] : memref<8x256xf32, #tpu.memory_space<vmem>>, vector<8x256xf32>
    tpu.vector_store %arg3[%c0_3, %c0_4], %2 {strides = array<i32>} : memref<8x256xf32, #tpu.memory_space<vmem>>, vector<8x256xf32>,
    return
  }
  func.func @transform_0(%arg0: i32) -> (i32, i32) {
    %c0_i32 = arith.constant 0 : i32
    %c0_i32_0 = arith.constant 0 : i32
    %c0_i32_1 = arith.constant 0 : i32
    return %c0_i32, %c0_i32_0 : i32, i32
  }
  func.func @transform_1(%arg0: i32) -> (i32, i32) {
    %c0_i32 = arith.constant 0 : i32
    %c0_i32_0 = arith.constant 0 : i32
    return %arg0, %c0_i32 : i32, i32
  }
  func.func @transform_2(%arg0: i32) -> (i32, i32) {
    %c0_i32 = arith.constant 0 : i32
    %c0_i32_0 = arith.constant 0 : i32
    return %arg0, %c0_i32 : i32, i32
  }
}

</mosaic_0001>

<llo_original>
// kernel: tile.9
$region0: #{tile.9}
  %s0 = inlined_call_operand.vmem [shape: f32[2,4,256], index: 0, kind: input, shape index: {}]
  %s1 = inlined_call_operand.vmem [shape: f32[8,256], index: 1, kind: output, shape index: {}]
  $region1: #{tile.9} parent=0
    #allocation0 [shape = 'u8[16384]{0}', space=vmem, size = 0x4000, scoped, tag = 'scoped mem for input reshape']
    %s3 = ssub.s32 16, 1
    %s4 = scalar_lea.vmem %s0, 12
    %v5 = vld [vmem:[%s4] sm:%s3]
    %s6 = scalar_lea.vmem [#allocation0], 24
    %7 = vst [vmem:[%s6] sm:%s3] %v5
    %s8 = scalar_lea.vmem %s0, 8
    %v9 = vld [vmem:[%s8] sm:%s3]
    %s10 = scalar_lea.vmem [#allocation0], 16
    %11 = vst [vmem:[%s10] sm:%s3] %v9
    %s12 = scalar_lea.vmem %s0, 4
    %v13 = vld [vmem:[%s12] sm:%s3]
    %s14 = scalar_lea.vmem [#allocation0], 8
    %15 = vst [vmem:[%s14] sm:%s3] %v13
    %v16 = vld [vmem:[%s0] sm:%s3]
    %17 = vst [vmem:[#allocation0] sm:%s3] %v16
    %v18 = vld [vmem:[#allocation0] sm:$0xf]
    %19 = vst [vmem:[%s1] sm:$0xf] %v18
    %s20 = scalar_lea.vmem [#allocation0], 8
    %v21 = vld [vmem:[%s20] sm:$0xf]
    %s22 = scalar_lea.vmem %s1, 8
    %23 = vst [vmem:[%s22] sm:$0xf] %v21
    %s24 = scalar_lea.vmem [#allocation0], 16
    %v25 = vld [vmem:[%s24] sm:$0xf]
    %s26 = scalar_lea.vmem %s1, 4
    %27 = vst [vmem:[%s26] sm:$0xf] %v25
    %s28 = scalar_lea.vmem [#allocation0], 24
    %v29 = vld [vmem:[%s28] sm:$0xf]
    %s30 = scalar_lea.vmem %s1, 12
    %31 = vst [vmem:[%s30] sm:$0xf] %v29

// kernel: box_pool.1
$region0: #{box_pool.1}
  #allocation0 [shape = 'u32[]', space=smem, size = 0x4, offset = 0x4, fixed_abs, tag = 'smem constant byte address 0x4 - core index']
  #allocation1 [shape = 'u32[72,128]{1,0:T(1,128)}', space=vmem, size = 0x9000, scoped, tag = 'internal scratch']
  %s0 = inlined_call_operand.vmem [shape: f32[8,256], index: 0, kind: input, shape index: {}]
  %s1 = inlined_call_operand.vmem [shape: f32[8,256], index: 1, kind: input, shape index: {}]
  %s2 = inlined_call_operand.vmem [shape: f32[8,256], index: 2, kind: output, shape index: {}]
  %s3 = sld [smem:[#allocation0]]
  $region18: #{box_pool.1} parent=0
    _
  %s5 = ssub.s32 1, %s3
  %s6 = scalar_select 0, %s5, %s3
  // Predicated region
  $region2: #{box_pool.1} parent=0 // pred_check
    _
  $region3: #{box_pool.1} parent=0 // pred_check_branch
    %8 = sbr.rel (0) target = $region5
  $region4: #{box_pool.1} parent=0 // pred_region
    _
  $region5: #{box_pool.1} parent=0 // pred_fallthru
    _
  // Predicated region
  $region6: #{box_pool.1} parent=0 // pred_check
    _
  $region7: #{box_pool.1} parent=0 // pred_check_branch
    %10 = sbr.rel (0) target = $region9
  $region8: #{box_pool.1} parent=0 // pred_region
    _
  $region9: #{box_pool.1} parent=0 // pred_fallthru
    _
  %v11 = vld [vmem:[%s1] sm:$0xff]
  %v12 = vld [vmem:[%s1 + $0x8] sm:$0xff]
  %v13 = vld [vmem:[%s0] sm:$0xff]
  %v14 = vld [vmem:[%s0 + $0x8] sm:$0xff]
  %v15 = vmul.f32 %v11, %v13
  %v16 = vmul.f32 %v12, %v14
  %17 = vst [vmem:[%s2] sm:$0xff] %v15
  %18 = vst [vmem:[%s2 + $0x8] sm:$0xff] %v16
  // Predicated region
  $region10: #{box_pool.1} parent=0 // pred_check
    _
  $region11: #{box_pool.1} parent=0 // pred_check_branch
    %20 = sbr.rel (0) target = $region13
  $region12: #{box_pool.1} parent=0 // pred_region
    _
  $region13: #{box_pool.1} parent=0 // pred_fallthru
    _
  // Predicated region
  $region14: #{box_pool.1} parent=0 // pred_check
    _
  $region15: #{box_pool.1} parent=0 // pred_check_branch
    %22 = sbr.rel (0) target = $region17
  $region16: #{box_pool.1} parent=0 // pred_region
    _
  $region17: #{box_pool.1} parent=0 // pred_fallthru
    _

</llo_original>
